<compile_context>
chip_gen: v5e
topology: v5e:2x2
jax: 0.10.0
libtpu: 0.0.40
codegen_flags: <defaults>
</compile_context>

<pallas_src>
import jax
import jax.numpy as jnp
import numpy as np
from jax.experimental import pallas as pl
from jax.experimental.pallas import tpu as pltpu

DELTA = 0.035
EPS = 0.75
GAMMA = 7.0
SCALE = 1.0 + GAMMA * DELTA       # 1 + gamma*delta
HALF_SCALE = 0.5 * SCALE

SUB, LANE = 8, 128                # one f32 vreg tile


def _tight_sigmoid_upper_kernel(params_ref, o_ref):
    # params_ref: SMEM (2,) f32 -> [m, b].   o_ref: VMEM (1, 128) f32.
    m = params_ref[0]
    b = params_ref[1]

    # Scalar (sreg) precompute of the two tanh half-arguments:
    #   lane 0: a = -eps  ->  x/2 = 0.5 * (b - eps*m)
    #   lane 1: a = 0     ->  x/2 = 0.5 * b
    xh0 = jnp.float32(0.5) * (b - jnp.float32(EPS) * m)
    xh1 = jnp.float32(0.5) * b

    lane = jax.lax.broadcasted_iota(jnp.int32, (SUB, LANE), 1)
    is_pt0 = lane == 0

    xh = jnp.where(is_pt0, xh0, xh1)                 # splat-select, no vector FMA
    # sigmoid(x) = 0.5*(1 + tanh(x/2))  =>  u = HALF_SCALE*(1 + tanh(x/2))
    # diff = target - u = (target - HALF_SCALE) - HALF_SCALE*tanh(x/2)
    tgt_adj = jnp.where(is_pt0,
                        jnp.float32(DELTA - HALF_SCALE),
                        jnp.float32(1.0 + DELTA - HALF_SCALE))
    diff = tgt_adj - jnp.float32(HALF_SCALE) * jnp.tanh(xh)   # single EUP pass
    sq = diff * diff

    # obj = sq[0,0] + sq[0,1]: one XLU lane-rotate + one VPU add instead of a
    # log-depth full-vreg reduction.  Lanes >= 2 of `total` are don't-care.
    total = sq + pltpu.roll(sq, shift=LANE - 1, axis=1)

    # Lane-dense row store (proven vector path); wrapper reads element [0, 0].
    o_ref[...] = total[:1, :]


@jax.jit
def tight_sigmoid_upper_forward(m, b):
    """m, b: shape-(1,) f32 parameter arrays. Returns the scalar objective."""
    params = jnp.concatenate(
        [m.reshape(-1).astype(jnp.float32), b.reshape(-1).astype(jnp.float32)])
    out = pl.pallas_call(
        _tight_sigmoid_upper_kernel,
        out_shape=jax.ShapeDtypeStruct((1, LANE), jnp.float32),
        in_specs=[pl.BlockSpec(memory_space=pltpu.MemorySpace.SMEM)],
        out_specs=pl.BlockSpec(memory_space=pltpu.MemorySpace.VMEM),
    )(params)
    return out[0, 0]


def _reference(m, b):
    sig = lambda x: 1.0 / (1.0 + np.exp(-x))
    u = lambda a: SCALE * sig(float(m[0]) * a + float(b[0]))
    return (DELTA - u(-EPS)) ** 2 + (1.0 + DELTA - u(0.0)) ** 2


if __name__ == "__main__":
    # Case 1: the module's __init__ values (m = b = 0).
    m0 = jnp.zeros((1,), jnp.float32)
    b0 = jnp.zeros((1,), jnp.float32)
    obj0 = jax.block_until_ready(tight_sigmoid_upper_forward(m0, b0))
    np.testing.assert_allclose(
        np.asarray(obj0), _reference(np.asarray(m0), np.asarray(b0)),
        rtol=1e-5, atol=1e-6)

    # Case 2: deterministic non-trivial parameters from PRNGKey(0).
    key = jax.random.PRNGKey(0)
    km, kb = jax.random.split(key)
    m1 = (0.5 * jax.random.normal(km, (1,))).astype(jnp.float32)
    b1 = (0.5 * jax.random.normal(kb, (1,))).astype(jnp.float32)
    obj1 = jax.block_until_ready(tight_sigmoid_upper_forward(m1, b1))
    np.testing.assert_allclose(
        np.asarray(obj1), _reference(np.asarray(m1), np.asarray(b1)),
        rtol=1e-5, atol=1e-6)

    print("KERNEL_OK")
</pallas_src>

<mosaic_0001>
module attributes {stable_mosaic.version = 11 : i64} {
  func.func @_tight_sigmoid_upper_kernel(%arg0: memref<2xf32, #tpu.memory_space<smem>>, %arg1: memref<1x128xf32, #tpu.memory_space<vmem>>) attributes {dimension_semantics = [], scalar_prefetch = 0 : i64, scratch_operands = 0 : i64, tpu.core_type = #tpu.core_type<tc>} {
    %c0 = arith.constant 0 : index
    %0 = memref.load %arg0[%c0] : memref<2xf32, #tpu.memory_space<smem>>
    %c1 = arith.constant 1 : index
    %1 = memref.load %arg0[%c1] : memref<2xf32, #tpu.memory_space<smem>>
    %cst = arith.constant 7.500000e-01 : f32
    %2 = arith.mulf %cst, %0 : f32
    %3 = arith.subf %1, %2 : f32
    %cst_0 = arith.constant 5.000000e-01 : f32
    %4 = arith.mulf %cst_0, %3 : f32
    %cst_1 = arith.constant 5.000000e-01 : f32
    %5 = arith.mulf %cst_1, %1 : f32
    %6 = tpu.iota {dimensions = array<i32: 1>} : vector<8x128xi32>
    %c0_i32 = arith.constant 0 : i32
    %7 = vector.broadcast %c0_i32 : i32 to vector<8x128xi32>
    %8 = arith.cmpi eq, %6, %7 : vector<8x128xi32>
    %9 = vector.broadcast %4 : f32 to vector<8x128xf32>
    %10 = vector.broadcast %5 : f32 to vector<8x128xf32>
    %11 = arith.select %8, %9, %10 : vector<8x128xi1>, vector<8x128xf32>
    %cst_2 = arith.constant -5.875000e-01 : f32
    %cst_3 = arith.constant 4.125000e-01 : f32
    %12 = vector.broadcast %cst_2 : f32 to vector<8x128xf32>
    %13 = vector.broadcast %cst_3 : f32 to vector<8x128xf32>
    %14 = arith.select %8, %12, %13 : vector<8x128xi1>, vector<8x128xf32>
    %15 = math.tanh %11 : vector<8x128xf32>
    %cst_4 = arith.constant 6.225000e-01 : f32
    %16 = vector.broadcast %cst_4 : f32 to vector<8x128xf32>
    %17 = arith.mulf %16, %15 : vector<8x128xf32>
    %18 = arith.subf %14, %17 : vector<8x128xf32>
    %19 = arith.mulf %18, %18 : vector<8x128xf32>
    %c127_i32 = arith.constant 127 : i32
    %20 = tpu.dynamic_rotate %19 by %c127_i32 dim 1 : vector<8x128xf32>, i32 -> vector<8x128xf32>
    %21 = arith.addf %19, %20 : vector<8x128xf32>
    %22 = vector.extract_strided_slice %21 {offsets = [0, 0], sizes = [1, 128], strides = [1, 1]} : vector<8x128xf32> to vector<1x128xf32>
    %c0_5 = arith.constant 0 : index
    %c0_6 = arith.constant 0 : index
    %23 = vector.load %arg1[%c0_5, %c0_6] : memref<1x128xf32, #tpu.memory_space<vmem>>, vector<1x128xf32>
    tpu.vector_store %arg1[%c0_5, %c0_6], %22 {strides = array<i32>} : memref<1x128xf32, #tpu.memory_space<vmem>>, vector<1x128xf32>,
    return
  }
}

</mosaic_0001>

<llo_original>
// kernel: tight_sigmoid_upper_forward.1
$region0: #{tight_sigmoid_upper_forward.1}
  #allocation0 [shape = 'u32[]', space=smem, size = 0x4, offset = 0x4, fixed_abs, tag = 'smem constant byte address 0x4 - core index']
  #allocation1 [shape = 'u32[72,128]{1,0:T(1,128)}', space=vmem, size = 0x9000, scoped, tag = 'internal scratch']
  %s0 = inlined_call_operand.vmem [shape: f32[2], index: 0, kind: input, shape index: {}]
  %s1 = inlined_call_operand.hbm [shape: f32[1,128], index: 1, kind: output, shape index: {}]
  %s2 = sld [smem:[#allocation0]]
  $region18: #{tight_sigmoid_upper_forward.1} parent=0
    _
  %s4 = ssub.s32 1, %s2
  %s5 = scalar_select 0, %s4, %s2
  $region1: #{tight_sigmoid_upper_forward.1} parent=0
    #allocation2 [shape = 'u8[512]{0}', space=smem, size = 0x200, scoped, tag = 'input window, operand 0, single buffered']
    #allocation3 [shape = 's32[1]{0}', space=sflag, size = 0x4, scoped, tag = 'scoped memory for tight_sigmoid_upper_forward.1']
    #allocation4 [shape = 's32[1]{0}', space=sflag, size = 0x4, scoped, tag = 'scoped memory for tight_sigmoid_upper_forward.1']
    #allocation5 [shape = 'u8[512]{0}', space=vmem, size = 0x400, scoped, tag = 'output window, operand 0, single buffered']
    %6 = vsyncpa [#allocation4], 0
    %7 = vsyncpa [#allocation3], 0
    // Predicated region
    $region2: #{tight_sigmoid_upper_forward.1} parent=1 // pred_check
      _
    $region3: #{tight_sigmoid_upper_forward.1} parent=1 // pred_check_branch
      %9 = sbr.rel (0) target = $region5
    $region4: #{tight_sigmoid_upper_forward.1} parent=1 // pred_region
      %11 = vsyncadd [#allocation4], 0
      %s13 = sshll.u32 %s0, 4
      %s14 = int_to_ptr.vmem [resolvable:$true] %s13
      %16 = dma.vmem_to_smem %s14, 16, [#allocation2], [#allocation4]
    $region5: #{tight_sigmoid_upper_forward.1} parent=1 // pred_fallthru
      _
    // Predicated region
    $region6: #{tight_sigmoid_upper_forward.1} parent=1 // pred_check
      _
    $region7: #{tight_sigmoid_upper_forward.1} parent=1 // pred_check_branch
      %18 = sbr.rel (0) target = $region9
    $region8: #{tight_sigmoid_upper_forward.1} parent=1 // pred_region
      %20 = dma.done [#allocation4], 16
    $region9: #{tight_sigmoid_upper_forward.1} parent=1 // pred_fallthru
      _
    %21 = sfence
    %s22 = sld [smem:[#allocation2]]
    %s23 = sld [smem:[#allocation2 + $0x1]]
    %s24 = smul.f32 %s22, 0.75
    %s25 = ssub.f32 %s23, %s24
    %s26 = smul.f32 %s25, 0.5
    %s27 = smul.f32 %s23, 0.5
    %v28 = vlaneseq
    %v29 = vand.u32 %v28, 127
    %vm30 = vcmp.eq.s32.totalorder %v29, 0
    %v31 = vstv %s26
    %v32 = vstv %s27
    %v33 = vsel %vm30, %v31, %v32
    %v34 = vsel %vm30, -0.5875, 0.4125
    %v35 = vtanh.pop %v33
    %v36 = vmul.f32 %v35, 0.6225
    %v37 = vsub.f32 %v34, %v36
    %v38 = vmul.f32 %v37, %v37
    %39 = vrot.lane.b32.xlu0 %v38, 127
    %v40 = vpop.permute.xlu0 %39
    %v41 = vadd.f32 %v38, %v40
    %42 = vst [vmem:[#allocation5] sm:$0x1] %v41
    // Predicated region
    $region10: #{tight_sigmoid_upper_forward.1} parent=1 // pred_check
      _
    $region11: #{tight_sigmoid_upper_forward.1} parent=1 // pred_check_branch
      %44 = sbr.rel (0) target = $region13
    $region12: #{tight_sigmoid_upper_forward.1} parent=1 // pred_region
      %46 = vsyncadd [#allocation3], 0
      %s48 = sshll.u32 [#allocation5], 4
      %s49 = int_to_ptr.vmem [resolvable:$true] %s48
      %s50 = sshll.u32 %s1, 4
      %s51 = int_to_ptr.hbm [resolvable:$true] %s50
      %53 = dma.vmem_to_hbm [thread:$0]  %s49, 16, %s51, [#allocation3]
    $region13: #{tight_sigmoid_upper_forward.1} parent=1 // pred_fallthru
      _
    // Predicated region
    $region14: #{tight_sigmoid_upper_forward.1} parent=1 // pred_check
      _
    $region15: #{tight_sigmoid_upper_forward.1} parent=1 // pred_check_branch
      %55 = sbr.rel (0) target = $region17
    $region16: #{tight_sigmoid_upper_forward.1} parent=1 // pred_region
      %57 = dma.done [#allocation3], 16
    $region17: #{tight_sigmoid_upper_forward.1} parent=1 // pred_fallthru
      _
    %58 = vsyncpa [#allocation3], 1
    %59 = vsyncpa [#allocation4], 1

</llo_original>
